<compile_context>
chip_gen: v6e
topology: v6e:2x2x1
jax: 0.10.0
libtpu: 0.0.40
codegen_flags: <defaults>
</compile_context>

<pallas_src>
import jax
import jax.numpy as jnp
from jax.experimental import pallas as pl
from jax.experimental.pallas import tpu as pltpu

# Module constants implied by __init__ / forward.
IN_CHANNELS = 256          # self.in_channels
LATENT_DIM = 512           # self.latent_dim
POOL_T, POOL_V = 31, 17    # nn.AvgPool2d((31, 17))
_FUSED = 2 * LATENT_DIM    # both heads' first layers fused: 1024


def _fused_heads_kernel(x_ref, w1_ref, b1_ref, w2_ref, b2_ref, o_ref):
    """Fused dual-head MLP on a pooled batch tile.

    x_ref : (TN, 256)   pooled (spatial-sum) features, bf16
    w1_ref: (256, 1024) [linear1 | linear2] fused, scaled by 1/(31*17), bf16
    b1_ref: (1, 1024)   f32
    w2_ref: (1024, 2)   block-diag([out_mean.W, out_log_var.W]), bf16
    b2_ref: (1, 2)      f32
    o_ref : (TN, 2)     f32; column 0 = m, column 1 = log_var
    """
    h = jnp.dot(x_ref[...], w1_ref[...], preferred_element_type=jnp.float32)
    # dropout1 / dropout2 are identity in eval mode.
    h = jnp.maximum(h + b1_ref[...], 0.0)
    o_ref[...] = (
        jnp.dot(h.astype(w2_ref.dtype), w2_ref[...],
                preferred_element_type=jnp.float32)
        + b2_ref[...]
    )


def pack_params(params, *, weight_dtype=jnp.bfloat16):
    """Fuse the two heads. Call ONCE (e.g. at model load), not per forward.

    - First layers concatenated into one (256, 1024) weight / (1, 1024) bias.
    - Second layers block-diagonalized into one (1024, 2) weight / (1, 2) bias.
    - AvgPool2d's 1/(31*17) scale is folded into the fused first-layer weight,
      so the wrapper only computes a spatial SUM.
    """
    inv_pool = 1.0 / float(POOL_T * POOL_V)
    w1f = jnp.concatenate([params["w1"], params["w2"]], axis=1) * inv_pool  # (256,1024)
    b1f = jnp.concatenate([params["b1"], params["b2"]], axis=1)             # (1,1024)
    zeros = jnp.zeros((LATENT_DIM, 1), jnp.float32)
    w2f = jnp.concatenate(
        [jnp.concatenate([params["wm"], zeros], axis=0),
         jnp.concatenate([zeros, params["wlv"]], axis=0)],
        axis=1,
    )                                                                        # (1024,2)
    b2f = jnp.concatenate([params["bm"], params["blv"]], axis=1)             # (1,2)
    return {
        "w1f": w1f.astype(weight_dtype),
        "b1f": b1f.astype(jnp.float32),
        "w2f": w2f.astype(weight_dtype),
        "b2f": b2f.astype(jnp.float32),
    }


def _round_up(x, m):
    return (x + m - 1) // m * m


def _pick_batch_tile(n):
    if n <= 256:
        # Single grid step: weights resident, zero per-step pipeline overhead.
        return _round_up(max(n, 16), 16)
    # Large batches: M=256 fills the 256x256 MXU on v6e/v7x (2x128 passes on
    # v5e) and yields >=2 "parallel" steps so v7x uses both TensorCores.
    return 256


def stgcn_regressor_head(x_nmctv, packed, *, batch_tile=None):
    """x_nmctv: (N, M, C, T, V) backbone feature. Returns (m, log_var), each (N, 1)."""
    N, M, C, T, V = x_nmctv.shape
    assert M == 1, "reshape(N, C, T, V) in the reference requires M == 1"
    assert (C, T, V) == (IN_CHANNELS, POOL_T, POOL_V)

    # AvgPool2d((31,17)) over an exactly (31,17) map == full spatial mean.
    # The 1/(31*17) is folded into w1f, so only a sum is needed; dtype=f32
    # keeps the reduction accumulating in f32 without materializing an f32
    # copy of the full feature map.
    pooled = jnp.sum(x_nmctv.reshape(N, C, T * V), axis=-1, dtype=jnp.float32)
    pooled = pooled.astype(packed["w1f"].dtype)                  # (N, 256) bf16

    tn = _pick_batch_tile(N) if batch_tile is None else batch_tile
    assert tn % 8 == 0, "batch tile must be a multiple of 8"
    n_pad = _round_up(N, tn)
    if n_pad != N:
        pooled = jnp.pad(pooled, ((0, n_pad - N), (0, 0)))
    grid = (n_pad // tn,)

    flops = 2 * n_pad * IN_CHANNELS * _FUSED + 2 * n_pad * _FUSED * 2
    bytes_accessed = (
        pooled.size * pooled.dtype.itemsize
        + sum(int(v.size) * v.dtype.itemsize for v in packed.values())
        + n_pad * 2 * 4
    )

    y = pl.pallas_call(
        _fused_heads_kernel,
        out_shape=jax.ShapeDtypeStruct((n_pad, 2), jnp.float32),
        grid=grid,
        in_specs=[
            pl.BlockSpec((tn, IN_CHANNELS), lambda i: (i, 0)),
            pl.BlockSpec((IN_CHANNELS, _FUSED), lambda i: (0, 0)),
            pl.BlockSpec((1, _FUSED), lambda i: (0, 0)),
            pl.BlockSpec((_FUSED, 2), lambda i: (0, 0)),
            pl.BlockSpec((1, 2), lambda i: (0, 0)),
        ],
        out_specs=pl.BlockSpec((tn, 2), lambda i: (i, 0)),
        compiler_params=pltpu.CompilerParams(
            dimension_semantics=("parallel",),
        ),
        cost_estimate=pl.CostEstimate(
            flops=flops, transcendentals=0, bytes_accessed=bytes_accessed),
    )(pooled, packed["w1f"], packed["b1f"], packed["w2f"], packed["b2f"])

    y = y[:N]
    m = y[:, 0:1]
    log_var = y[:, 1:2]
    return m, log_var


def init_params(key, init_std=0.01):
    """normal_init(std=0.01), bias=0 — matches the PyTorch module init."""
    k1, k2, k3, k4 = jax.random.split(key, 4)
    # Stored transposed relative to torch (in, out) so the math is x @ W + b.
    return {
        "w1":  init_std * jax.random.normal(k1, (IN_CHANNELS, LATENT_DIM), jnp.float32),
        "b1":  jnp.zeros((1, LATENT_DIM), jnp.float32),
        "wm":  init_std * jax.random.normal(k2, (LATENT_DIM, 1), jnp.float32),
        "bm":  jnp.zeros((1, 1), jnp.float32),
        "w2":  init_std * jax.random.normal(k3, (IN_CHANNELS, LATENT_DIM), jnp.float32),
        "b2":  jnp.zeros((1, LATENT_DIM), jnp.float32),
        "wlv": init_std * jax.random.normal(k4, (LATENT_DIM, 1), jnp.float32),
        "blv": jnp.zeros((1, 1), jnp.float32),
    }


def _reference(x_nmctv, p):
    N, M, C, T, V = x_nmctv.shape
    x = x_nmctv.reshape(N, C, T, V).astype(jnp.float32)
    pooled = jnp.mean(x, axis=(2, 3))                      # AvgPool2d((31,17)) -> (N, C)
    h1 = jnp.maximum(pooled @ p["w1"] + p["b1"], 0.0)
    m = h1 @ p["wm"] + p["bm"]
    h2 = jnp.maximum(pooled @ p["w2"] + p["b2"], 0.0)
    lv = h2 @ p["wlv"] + p["blv"]
    return m, lv


if __name__ == "__main__":
    key = jax.random.PRNGKey(0)
    kx, kx2, kp = jax.random.split(key, 3)

    # Small batch; C/T/V are fixed by the module (AvgPool2d((31,17)), Linear(256, 512)).
    N, M = 16, 1
    x = jax.random.normal(kx, (N, M, IN_CHANNELS, POOL_T, POOL_V), jnp.float32)
    params = init_params(kp)
    packed = pack_params(params)          # fused + folded ONCE, outside the forward

    # bf16 weights/activations drift slightly from the f32 torch reference.
    atol, rtol = 2e-4, 2e-2

    head = jax.jit(stgcn_regressor_head)
    m, log_var = head(x, packed)          # N=16 -> single grid step
    jax.block_until_ready((m, log_var))

    m_ref, lv_ref = _reference(x, params)
    assert m.shape == (N, 1) and log_var.shape == (N, 1)
    assert jnp.allclose(m, m_ref, atol=atol, rtol=rtol)
    assert jnp.allclose(log_var, lv_ref, atol=atol, rtol=rtol)

    # Multi-step / padded path: N=24 with tile 16 -> pad to 32, grid=(2,).
    N2 = 24
    x2 = jax.random.normal(kx2, (N2, M, IN_CHANNELS, POOL_T, POOL_V), jnp.float32)
    m2, lv2 = stgcn_regressor_head(x2, packed, batch_tile=16)
    jax.block_until_ready((m2, lv2))
    m2_ref, lv2_ref = _reference(x2, params)
    assert m2.shape == (N2, 1) and lv2.shape == (N2, 1)
    assert jnp.allclose(m2, m2_ref, atol=atol, rtol=rtol)
    assert jnp.allclose(lv2, lv2_ref, atol=atol, rtol=rtol)

    print("KERNEL_OK")
</pallas_src>

<mosaic_0001>
module attributes {stable_mosaic.version = 11 : i64} {
  func.func @_fused_heads_kernel(%arg0: i32, %arg1: memref<16x256xbf16, #tpu.memory_space<vmem>>, %arg2: memref<256x1024xbf16, #tpu.memory_space<vmem>>, %arg3: memref<1x1024xf32, #tpu.memory_space<vmem>>, %arg4: memref<1024x2xbf16, #tpu.memory_space<vmem>>, %arg5: memref<1x2xf32, #tpu.memory_space<vmem>>, %arg6: memref<16x2xf32, #tpu.memory_space<vmem>>) attributes {dimension_semantics = [#tpu.dimension_semantics<parallel>], iteration_bounds = array<i64: 1>, scalar_prefetch = 0 : i64, scratch_operands = 0 : i64, tpu.core_type = #tpu.core_type<tc>, window_params = [{transform_indices = @transform_0, window_bounds = array<i64: 16, 256>}, {pipeline_mode = #tpu.pipeline_mode<synchronous>, transform_indices = @transform_1, window_bounds = array<i64: 256, 1024>}, {pipeline_mode = #tpu.pipeline_mode<synchronous>, transform_indices = @transform_2, window_bounds = array<i64: 1, 1024>}, {pipeline_mode = #tpu.pipeline_mode<synchronous>, transform_indices = @transform_3, window_bounds = array<i64: 1024, 2>}, {pipeline_mode = #tpu.pipeline_mode<synchronous>, transform_indices = @transform_4, window_bounds = array<i64: 1, 2>}, {transform_indices = @transform_5, window_bounds = array<i64: 16, 2>}]} {
    %c0 = arith.constant 0 : index
    %c0_0 = arith.constant 0 : index
    %0 = vector.load %arg1[%c0, %c0_0] : memref<16x256xbf16, #tpu.memory_space<vmem>>, vector<16x256xbf16>
    %c0_1 = arith.constant 0 : index
    %c0_2 = arith.constant 0 : index
    %1 = vector.load %arg2[%c0_1, %c0_2] : memref<256x1024xbf16, #tpu.memory_space<vmem>>, vector<256x1024xbf16>
    %cst = arith.constant dense<0.000000e+00> : vector<16x1024xf32>
    %2 = tpu.matmul %0, %1, %cst {dimension_numbers = #tpu.dot_dimension_numbers<[1], [0], [0], [1], [0, 0, 1, 1], [], []>} : vector<16x256xbf16>, vector<256x1024xbf16>, vector<16x1024xf32> -> vector<16x1024xf32>
    %c0_3 = arith.constant 0 : index
    %c0_4 = arith.constant 0 : index
    %3 = vector.load %arg3[%c0_3, %c0_4] : memref<1x1024xf32, #tpu.memory_space<vmem>>, vector<1x1024xf32>
    %4 = vector.broadcast %3 : vector<1x1024xf32> to vector<16x1024xf32>
    %5 = arith.addf %2, %4 : vector<16x1024xf32>
    %cst_5 = arith.constant 0.000000e+00 : f32
    %6 = vector.broadcast %cst_5 : f32 to vector<16x1024xf32>
    %7 = arith.maximumf %5, %6 : vector<16x1024xf32>
    %8 = arith.truncf %7 : vector<16x1024xf32> to vector<16x1024xbf16>
    %c0_6 = arith.constant 0 : index
    %c0_7 = arith.constant 0 : index
    %9 = vector.load %arg4[%c0_6, %c0_7] : memref<1024x2xbf16, #tpu.memory_space<vmem>>, vector<1024x2xbf16>
    %cst_8 = arith.constant dense<0.000000e+00> : vector<16x2xf32>
    %10 = tpu.matmul %8, %9, %cst_8 {dimension_numbers = #tpu.dot_dimension_numbers<[1], [0], [0], [1], [0, 0, 1, 1], [], []>} : vector<16x1024xbf16>, vector<1024x2xbf16>, vector<16x2xf32> -> vector<16x2xf32>
    %c0_9 = arith.constant 0 : index
    %c0_10 = arith.constant 0 : index
    %11 = vector.load %arg5[%c0_9, %c0_10] : memref<1x2xf32, #tpu.memory_space<vmem>>, vector<1x2xf32>
    %12 = vector.broadcast %11 : vector<1x2xf32> to vector<16x2xf32>
    %13 = arith.addf %10, %12 : vector<16x2xf32>
    %c0_11 = arith.constant 0 : index
    %c0_12 = arith.constant 0 : index
    %14 = vector.load %arg6[%c0_11, %c0_12] : memref<16x2xf32, #tpu.memory_space<vmem>>, vector<16x2xf32>
    tpu.vector_store %arg6[%c0_11, %c0_12], %13 {strides = array<i32>} : memref<16x2xf32, #tpu.memory_space<vmem>>, vector<16x2xf32>,
    return
  }
  func.func @transform_0(%arg0: i32) -> (i32, i32) {
    %c0_i32 = arith.constant 0 : i32
    %c0_i32_0 = arith.constant 0 : i32
    return %arg0, %c0_i32 : i32, i32
  }
  func.func @transform_1(%arg0: i32) -> (i32, i32) {
    %c0_i32 = arith.constant 0 : i32
    %c0_i32_0 = arith.constant 0 : i32
    %c0_i32_1 = arith.constant 0 : i32
    return %c0_i32, %c0_i32_0 : i32, i32
  }
  func.func @transform_2(%arg0: i32) -> (i32, i32) {
    %c0_i32 = arith.constant 0 : i32
    %c0_i32_0 = arith.constant 0 : i32
    %c0_i32_1 = arith.constant 0 : i32
    return %c0_i32, %c0_i32_0 : i32, i32
  }
  func.func @transform_3(%arg0: i32) -> (i32, i32) {
    %c0_i32 = arith.constant 0 : i32
    %c0_i32_0 = arith.constant 0 : i32
    %c0_i32_1 = arith.constant 0 : i32
    return %c0_i32, %c0_i32_0 : i32, i32
  }
  func.func @transform_4(%arg0: i32) -> (i32, i32) {
    %c0_i32 = arith.constant 0 : i32
    %c0_i32_0 = arith.constant 0 : i32
    %c0_i32_1 = arith.constant 0 : i32
    return %c0_i32, %c0_i32_0 : i32, i32
  }
  func.func @transform_5(%arg0: i32) -> (i32, i32) {
    %c0_i32 = arith.constant 0 : i32
    %c0_i32_0 = arith.constant 0 : i32
    return %arg0, %c0_i32 : i32, i32
  }
}

</mosaic_0001>

<llo_original>
// kernel: stgcn_regressor_head.1
$region0: #{stgcn_regressor_head.1}
  #allocation0 [shape = 'u32[]', space=smem, size = 0x4, offset = 0x4, fixed_abs, tag = 'smem constant byte address 0x4 - core index']
  #allocation1 [shape = 'u32[144,128]{1,0:T(1,128)}', space=vmem, size = 0x12000, scoped, tag = 'internal scratch']
  %s0 = inlined_call_operand.vmem [shape: bf16[16,256], index: 0, kind: input, shape index: {}]
  %s1 = inlined_call_operand.vmem [shape: bf16[256,1024], index: 1, kind: input, shape index: {}]
  %s2 = inlined_call_operand.vmem [shape: f32[1,1024], index: 2, kind: input, shape index: {}]
  %s3 = inlined_call_operand.vmem [shape: bf16[1024,2], index: 3, kind: input, shape index: {}]
  %s4 = inlined_call_operand.vmem [shape: f32[1,2], index: 4, kind: input, shape index: {}]
  %s5 = inlined_call_operand.vmem [shape: f32[16,2], index: 5, kind: output, shape index: {}]
  %s6 = sld [smem:[#allocation0]]
  $region30: #{stgcn_regressor_head.1} parent=0
    _
  %s8 = ssub.s32 1, %s6
  %s9 = scalar_select 0, %s8, %s6
  // Predicated region
  $region2: #{stgcn_regressor_head.1} parent=0 // pred_check
    _
  $region3: #{stgcn_regressor_head.1} parent=0 // pred_check_branch
    %11 = sbr.rel (0) target = $region5
  $region4: #{stgcn_regressor_head.1} parent=0 // pred_region
    _
  $region5: #{stgcn_regressor_head.1} parent=0 // pred_fallthru
    _
  // Predicated region
  $region6: #{stgcn_regressor_head.1} parent=0 // pred_check
    _
  $region7: #{stgcn_regressor_head.1} parent=0 // pred_check_branch
    %13 = sbr.rel (0) target = $region9
  $region8: #{stgcn_regressor_head.1} parent=0 // pred_region
    _
  $region9: #{stgcn_regressor_head.1} parent=0 // pred_fallthru
    _
  // Predicated region
  $region10: #{stgcn_regressor_head.1} parent=0 // pred_check
    _
  $region11: #{stgcn_regressor_head.1} parent=0 // pred_check_branch
    %15 = sbr.rel (0) target = $region13
  $region12: #{stgcn_regressor_head.1} parent=0 // pred_region
    _
  $region13: #{stgcn_regressor_head.1} parent=0 // pred_fallthru
    _
  // Predicated region
  $region14: #{stgcn_regressor_head.1} parent=0 // pred_check
    _
  $region15: #{stgcn_regressor_head.1} parent=0 // pred_check_branch
    %17 = sbr.rel (0) target = $region17
  $region16: #{stgcn_regressor_head.1} parent=0 // pred_region
    _
  $region17: #{stgcn_regressor_head.1} parent=0 // pred_fallthru
    _
  // Predicated region
  $region18: #{stgcn_regressor_head.1} parent=0 // pred_check
    _
  $region19: #{stgcn_regressor_head.1} parent=0 // pred_check_branch
    %19 = sbr.rel (0) target = $region21
  $region20: #{stgcn_regressor_head.1} parent=0 // pred_region
    _
  $region21: #{stgcn_regressor_head.1} parent=0 // pred_fallthru
    _
  %v21 = vld [vmem:[%s0] sm:$0xff]
  %v22 = vld [vmem:[%s0 + $0x8] sm:$0xff]
  %v23 = vld [vmem:[%s1] sm:$0xff]
  %v24 = vld [vmem:[%s1 + $0x8] sm:$0xff]
  %v25 = vld [vmem:[%s1 + $0x10] sm:$0xff]
  %v26 = vld [vmem:[%s1 + $0x18] sm:$0xff]
  %v27 = vld [vmem:[%s1 + $0x20] sm:$0xff]
  %v28 = vld [vmem:[%s1 + $0x28] sm:$0xff]
  %v29 = vld [vmem:[%s1 + $0x30] sm:$0xff]
  %v30 = vld [vmem:[%s1 + $0x38] sm:$0xff]
  %v31 = vld [vmem:[%s1 + $0x40] sm:$0xff]
  %v32 = vld [vmem:[%s1 + $0x48] sm:$0xff]
  %v33 = vld [vmem:[%s1 + $0x50] sm:$0xff]
  %v34 = vld [vmem:[%s1 + $0x58] sm:$0xff]
  %v35 = vld [vmem:[%s1 + $0x60] sm:$0xff]
  %v36 = vld [vmem:[%s1 + $0x68] sm:$0xff]
  %v37 = vld [vmem:[%s1 + $0x70] sm:$0xff]
  %v38 = vld [vmem:[%s1 + $0x78] sm:$0xff]
  %v39 = vld [vmem:[%s1 + $0x80] sm:$0xff]
  %v40 = vld [vmem:[%s1 + $0x88] sm:$0xff]
  %v41 = vld [vmem:[%s1 + $0x90] sm:$0xff]
  %v42 = vld [vmem:[%s1 + $0x98] sm:$0xff]
  %v43 = vld [vmem:[%s1 + $0xa0] sm:$0xff]
  %v44 = vld [vmem:[%s1 + $0xa8] sm:$0xff]
  %v45 = vld [vmem:[%s1 + $0xb0] sm:$0xff]
  %v46 = vld [vmem:[%s1 + $0xb8] sm:$0xff]
  %v47 = vld [vmem:[%s1 + $0xc0] sm:$0xff]
  %v48 = vld [vmem:[%s1 + $0xc8] sm:$0xff]
  %v49 = vld [vmem:[%s1 + $0xd0] sm:$0xff]
  %v50 = vld [vmem:[%s1 + $0xd8] sm:$0xff]
  %v51 = vld [vmem:[%s1 + $0xe0] sm:$0xff]
  %v52 = vld [vmem:[%s1 + $0xe8] sm:$0xff]
  %v53 = vld [vmem:[%s1 + $0xf0] sm:$0xff]
  %v54 = vld [vmem:[%s1 + $0xf8] sm:$0xff]
  %v55 = vld [vmem:[%s1 + $0x100] sm:$0xff]
  %v56 = vld [vmem:[%s1 + $0x108] sm:$0xff]
  %v57 = vld [vmem:[%s1 + $0x110] sm:$0xff]
  %v58 = vld [vmem:[%s1 + $0x118] sm:$0xff]
  %v59 = vld [vmem:[%s1 + $0x120] sm:$0xff]
  %v60 = vld [vmem:[%s1 + $0x128] sm:$0xff]
  %v61 = vld [vmem:[%s1 + $0x130] sm:$0xff]
  %v62 = vld [vmem:[%s1 + $0x138] sm:$0xff]
  %v63 = vld [vmem:[%s1 + $0x140] sm:$0xff]
  %v64 = vld [vmem:[%s1 + $0x148] sm:$0xff]
  %v65 = vld [vmem:[%s1 + $0x150] sm:$0xff]
  %v66 = vld [vmem:[%s1 + $0x158] sm:$0xff]
  %v67 = vld [vmem:[%s1 + $0x160] sm:$0xff]
  %v68 = vld [vmem:[%s1 + $0x168] sm:$0xff]
  %v69 = vld [vmem:[%s1 + $0x170] sm:$0xff]
  %v70 = vld [vmem:[%s1 + $0x178] sm:$0xff]
  %v71 = vld [vmem:[%s1 + $0x180] sm:$0xff]
  %v72 = vld [vmem:[%s1 + $0x188] sm:$0xff]
  %v73 = vld [vmem:[%s1 + $0x190] sm:$0xff]
  %v74 = vld [vmem:[%s1 + $0x198] sm:$0xff]
  %v75 = vld [vmem:[%s1 + $0x1a0] sm:$0xff]
  %v76 = vld [vmem:[%s1 + $0x1a8] sm:$0xff]
  %v77 = vld [vmem:[%s1 + $0x1b0] sm:$0xff]
  %v78 = vld [vmem:[%s1 + $0x1b8] sm:$0xff]
  %v79 = vld [vmem:[%s1 + $0x1c0] sm:$0xff]
  %v80 = vld [vmem:[%s1 + $0x1c8] sm:$0xff]
  %v81 = vld [vmem:[%s1 + $0x1d0] sm:$0xff]
  %v82 = vld [vmem:[%s1 + $0x1d8] sm:$0xff]
  %v83 = vld [vmem:[%s1 + $0x1e0] sm:$0xff]
  %v84 = vld [vmem:[%s1 + $0x1e8] sm:$0xff]
  %v85 = vld [vmem:[%s1 + $0x1f0] sm:$0xff]
  %v86 = vld [vmem:[%s1 + $0x1f8] sm:$0xff]
  %v87 = vld [vmem:[%s1 + $0x200] sm:$0xff]
  %v88 = vld [vmem:[%s1 + $0x208] sm:$0xff]
  %v89 = vld [vmem:[%s1 + $0x210] sm:$0xff]
  %v90 = vld [vmem:[%s1 + $0x218] sm:$0xff]
  %v91 = vld [vmem:[%s1 + $0x220] sm:$0xff]
  %v92 = vld [vmem:[%s1 + $0x228] sm:$0xff]
  %v93 = vld [vmem:[%s1 + $0x230] sm:$0xff]
  %v94 = vld [vmem:[%s1 + $0x238] sm:$0xff]
  %v95 = vld [vmem:[%s1 + $0x240] sm:$0xff]
  %v96 = vld [vmem:[%s1 + $0x248] sm:$0xff]
  %v97 = vld [vmem:[%s1 + $0x250] sm:$0xff]
  %v98 = vld [vmem:[%s1 + $0x258] sm:$0xff]
  %v99 = vld [vmem:[%s1 + $0x260] sm:$0xff]
  %v100 = vld [vmem:[%s1 + $0x268] sm:$0xff]
  %v101 = vld [vmem:[%s1 + $0x270] sm:$0xff]
  %v102 = vld [vmem:[%s1 + $0x278] sm:$0xff]
  %v103 = vld [vmem:[%s1 + $0x280] sm:$0xff]
  %v104 = vld [vmem:[%s1 + $0x288] sm:$0xff]
  %v105 = vld [vmem:[%s1 + $0x290] sm:$0xff]
  %v106 = vld [vmem:[%s1 + $0x298] sm:$0xff]
  %v107 = vld [vmem:[%s1 + $0x2a0] sm:$0xff]
  %v108 = vld [vmem:[%s1 + $0x2a8] sm:$0xff]
  %v109 = vld [vmem:[%s1 + $0x2b0] sm:$0xff]
  %v110 = vld [vmem:[%s1 + $0x2b8] sm:$0xff]
  %v111 = vld [vmem:[%s1 + $0x2c0] sm:$0xff]
  %v112 = vld [vmem:[%s1 + $0x2c8] sm:$0xff]
  %v113 = vld [vmem:[%s1 + $0x2d0] sm:$0xff]
  %v114 = vld [vmem:[%s1 + $0x2d8] sm:$0xff]
  %v115 = vld [vmem:[%s1 + $0x2e0] sm:$0xff]
  %v116 = vld [vmem:[%s1 + $0x2e8] sm:$0xff]
  %v117 = vld [vmem:[%s1 + $0x2f0] sm:$0xff]
  %v118 = vld [vmem:[%s1 + $0x2f8] sm:$0xff]
  %v119 = vld [vmem:[%s1 + $0x300] sm:$0xff]
  %v120 = vld [vmem:[%s1 + $0x308] sm:$0xff]
  %v121 = vld [vmem:[%s1 + $0x310] sm:$0xff]
  %v122 = vld [vmem:[%s1 + $0x318] sm:$0xff]
  %v123 = vld [vmem:[%s1 + $0x320] sm:$0xff]
  %v124 = vld [vmem:[%s1 + $0x328] sm:$0xff]
  %v125 = vld [vmem:[%s1 + $0x330] sm:$0xff]
  %v126 = vld [vmem:[%s1 + $0x338] sm:$0xff]
  %v127 = vld [vmem:[%s1 + $0x340] sm:$0xff]
  %v128 = vld [vmem:[%s1 + $0x348] sm:$0xff]
  %v129 = vld [vmem:[%s1 + $0x350] sm:$0xff]
  %v130 = vld [vmem:[%s1 + $0x358] sm:$0xff]
  %v131 = vld [vmem:[%s1 + $0x360] sm:$0xff]
  %v132 = vld [vmem:[%s1 + $0x368] sm:$0xff]
  %v133 = vld [vmem:[%s1 + $0x370] sm:$0xff]
  %v134 = vld [vmem:[%s1 + $0x378] sm:$0xff]
  %v135 = vld [vmem:[%s1 + $0x380] sm:$0xff]
  %v136 = vld [vmem:[%s1 + $0x388] sm:$0xff]
  %v137 = vld [vmem:[%s1 + $0x390] sm:$0xff]
  %v138 = vld [vmem:[%s1 + $0x398] sm:$0xff]
  %v139 = vld [vmem:[%s1 + $0x3a0] sm:$0xff]
  %v140 = vld [vmem:[%s1 + $0x3a8] sm:$0xff]
  %v141 = vld [vmem:[%s1 + $0x3b0] sm:$0xff]
  %v142 = vld [vmem:[%s1 + $0x3b8] sm:$0xff]
  %v143 = vld [vmem:[%s1 + $0x3c0] sm:$0xff]
  %v144 = vld [vmem:[%s1 + $0x3c8] sm:$0xff]
  %v145 = vld [vmem:[%s1 + $0x3d0] sm:$0xff]
  %v146 = vld [vmem:[%s1 + $0x3d8] sm:$0xff]
  %v147 = vld [vmem:[%s1 + $0x3e0] sm:$0xff]
  %v148 = vld [vmem:[%s1 + $0x3e8] sm:$0xff]
  %v149 = vld [vmem:[%s1 + $0x3f0] sm:$0xff]
  %v150 = vld [vmem:[%s1 + $0x3f8] sm:$0xff]
  %v151 = vld [vmem:[%s2] sm:$0xff]
  %v153 = vlaneseq
  %v154 = vshrl.u32 %v153, 7
  %v155 = vsub.s32 0, %v154
  %v156 = vrot.slane %v151, %v155
  %v157 = vlaneseq
  %v158 = vshrl.u32 %v157, 7
  %v159 = vsub.s32 1, %v158
  %v160 = vrot.slane %v151, %v159
  %v161 = vlaneseq
  %v162 = vshrl.u32 %v161, 7
  %v163 = vsub.s32 2, %v162
  %v164 = vrot.slane %v151, %v163
  %v165 = vlaneseq
  %v166 = vshrl.u32 %v165, 7
  %v167 = vsub.s32 3, %v166
  %v168 = vrot.slane %v151, %v167
  %v169 = vlaneseq
  %v170 = vshrl.u32 %v169, 7
  %v171 = vsub.s32 4, %v170
  %v172 = vrot.slane %v151, %v171
  %v173 = vlaneseq
  %v174 = vshrl.u32 %v173, 7
  %v175 = vsub.s32 5, %v174
  %v176 = vrot.slane %v151, %v175
  %v177 = vlaneseq
  %v178 = vshrl.u32 %v177, 7
  %v179 = vsub.s32 6, %v178
  %v180 = vrot.slane %v151, %v179
  %v181 = vlaneseq
  %v182 = vshrl.u32 %v181, 7
  %v183 = vsub.s32 7, %v182
  %v184 = vrot.slane %v151, %v183
  %v195 = vunpack.c.l.b16 %v21
  %v196 = vunpack.c.h.b16 %v21
  %v197 = vunpack.c.l.b16 %v22
  %v198 = vunpack.c.h.b16 %v22
  %v199 = vpack.c.b16 %v197, %v195
  %v200 = vpack.c.b16 %v198, %v196
  %v331 = vunpack.c.l.b16 %v23
  %v332 = vunpack.c.h.b16 %v23
  %v333 = vunpack.c.l.b16 %v24
  %v334 = vunpack.c.h.b16 %v24
  %v335 = vunpack.c.l.b16 %v25
  %v336 = vunpack.c.h.b16 %v25
  %v337 = vunpack.c.l.b16 %v26
  %v338 = vunpack.c.h.b16 %v26
  %v339 = vunpack.c.l.b16 %v27
  %v340 = vunpack.c.h.b16 %v27
  %v341 = vunpack.c.l.b16 %v28
  %v342 = vunpack.c.h.b16 %v28
  %v343 = vunpack.c.l.b16 %v29
  %v344 = vunpack.c.h.b16 %v29
  %v345 = vunpack.c.l.b16 %v30
  %v346 = vunpack.c.h.b16 %v30
  %v347 = vunpack.c.l.b16 %v31
  %v348 = vunpack.c.h.b16 %v31
  %v349 = vunpack.c.l.b16 %v32
  %v350 = vunpack.c.h.b16 %v32
  %v351 = vunpack.c.l.b16 %v33
  %v352 = vunpack.c.h.b16 %v33
  %v353 = vunpack.c.l.b16 %v34
  %v354 = vunpack.c.h.b16 %v34
  %v355 = vunpack.c.l.b16 %v35
  %v356 = vunpack.c.h.b16 %v35
  %v357 = vunpack.c.l.b16 %v36
  %v358 = vunpack.c.h.b16 %v36
  %v359 = vunpack.c.l.b16 %v37
  %v360 = vunpack.c.h.b16 %v37
  %v361 = vunpack.c.l.b16 %v38
  %v362 = vunpack.c.h.b16 %v38
  %v363 = vunpack.c.l.b16 %v39
  %v364 = vunpack.c.h.b16 %v39
  %v365 = vunpack.c.l.b16 %v40
  %v366 = vunpack.c.h.b16 %v40
  %v367 = vunpack.c.l.b16 %v41
  %v368 = vunpack.c.h.b16 %v41
  %v369 = vunpack.c.l.b16 %v42
  %v370 = vunpack.c.h.b16 %v42
  %v371 = vunpack.c.l.b16 %v43
  %v372 = vunpack.c.h.b16 %v43
  %v373 = vunpack.c.l.b16 %v44
  %v374 = vunpack.c.h.b16 %v44
  %v375 = vunpack.c.l.b16 %v45
  %v376 = vunpack.c.h.b16 %v45
  %v377 = vunpack.c.l.b16 %v46
  %v378 = vunpack.c.h.b16 %v46
  %v379 = vunpack.c.l.b16 %v47
  %v380 = vunpack.c.h.b16 %v47
  %v381 = vunpack.c.l.b16 %v48
  %v382 = vunpack.c.h.b16 %v48
  %v383 = vunpack.c.l.b16 %v49
  %v384 = vunpack.c.h.b16 %v49
  %v385 = vunpack.c.l.b16 %v50
  %v386 = vunpack.c.h.b16 %v50
  %v387 = vunpack.c.l.b16 %v51
  %v388 = vunpack.c.h.b16 %v51
  %v389 = vunpack.c.l.b16 %v52
  %v390 = vunpack.c.h.b16 %v52
  %v391 = vunpack.c.l.b16 %v53
  %v392 = vunpack.c.h.b16 %v53
  %v393 = vunpack.c.l.b16 %v54
  %v394 = vunpack.c.h.b16 %v54
  %v395 = vunpack.c.l.b16 %v55
  %v396 = vunpack.c.h.b16 %v55
  %v397 = vunpack.c.l.b16 %v56
  %v398 = vunpack.c.h.b16 %v56
  %v399 = vunpack.c.l.b16 %v57
  %v400 = vunpack.c.h.b16 %v57
  %v401 = vunpack.c.l.b16 %v58
  %v402 = vunpack.c.h.b16 %v58
  %v403 = vunpack.c.l.b16 %v59
  %v404 = vunpack.c.h.b16 %v59
  %v405 = vunpack.c.l.b16 %v60
  %v406 = vunpack.c.h.b16 %v60
  %v407 = vunpack.c.l.b16 %v61
  %v408 = vunpack.c.h.b16 %v61
  %v409 = vunpack.c.l.b16 %v62
  %v410 = vunpack.c.h.b16 %v62
  %v411 = vunpack.c.l.b16 %v63
  %v412 = vunpack.c.h.b16 %v63
  %v413 = vunpack.c.l.b16 %v64
  %v414 = vunpack.c.h.b16 %v64
  %v415 = vunpack.c.l.b16 %v65
  %v416 = vunpack.c.h.b16 %v65
  %v417 = vunpack.c.l.b16 %v66
  %v418 = vunpack.c.h.b16 %v66
  %v419 = vunpack.c.l.b16 %v67
  %v420 = vunpack.c.h.b16 %v67
  %v421 = vunpack.c.l.b16 %v68
  %v422 = vunpack.c.h.b16 %v68
  %v423 = vunpack.c.l.b16 %v69
  %v424 = vunpack.c.h.b16 %v69
  %v425 = vunpack.c.l.b16 %v70
  %v426 = vunpack.c.h.b16 %v70
  %v427 = vunpack.c.l.b16 %v71
  %v428 = vunpack.c.h.b16 %v71
  %v429 = vunpack.c.l.b16 %v72
  %v430 = vunpack.c.h.b16 %v72
  %v431 = vunpack.c.l.b16 %v73
  %v432 = vunpack.c.h.b16 %v73
  %v433 = vunpack.c.l.b16 %v74
  %v434 = vunpack.c.h.b16 %v74
  %v435 = vunpack.c.l.b16 %v75
  %v436 = vunpack.c.h.b16 %v75
  %v437 = vunpack.c.l.b16 %v76
  %v438 = vunpack.c.h.b16 %v76
  %v439 = vunpack.c.l.b16 %v77
  %v440 = vunpack.c.h.b16 %v77
  %v441 = vunpack.c.l.b16 %v78
  %v442 = vunpack.c.h.b16 %v78
  %v443 = vunpack.c.l.b16 %v79
  %v444 = vunpack.c.h.b16 %v79
  %v445 = vunpack.c.l.b16 %v80
  %v446 = vunpack.c.h.b16 %v80
  %v447 = vunpack.c.l.b16 %v81
  %v448 = vunpack.c.h.b16 %v81
  %v449 = vunpack.c.l.b16 %v82
  %v450 = vunpack.c.h.b16 %v82
  %v451 = vunpack.c.l.b16 %v83
  %v452 = vunpack.c.h.b16 %v83
  %v453 = vunpack.c.l.b16 %v84
  %v454 = vunpack.c.h.b16 %v84
  %v455 = vunpack.c.l.b16 %v85
  %v456 = vunpack.c.h.b16 %v85
  %v457 = vunpack.c.l.b16 %v86
  %v458 = vunpack.c.h.b16 %v86
  %v459 = vunpack.c.l.b16 %v87
  %v460 = vunpack.c.h.b16 %v87
  %v461 = vunpack.c.l.b16 %v88
  %v462 = vunpack.c.h.b16 %v88
  %v463 = vunpack.c.l.b16 %v89
  %v464 = vunpack.c.h.b16 %v89
  %v465 = vunpack.c.l.b16 %v90
  %v466 = vunpack.c.h.b16 %v90
  %v467 = vunpack.c.l.b16 %v91
  %v468 = vunpack.c.h.b16 %v91
  %v469 = vunpack.c.l.b16 %v92
  %v470 = vunpack.c.h.b16 %v92
  %v471 = vunpack.c.l.b16 %v93
  %v472 = vunpack.c.h.b16 %v93
  %v473 = vunpack.c.l.b16 %v94
  %v474 = vunpack.c.h.b16 %v94
  %v475 = vunpack.c.l.b16 %v95
  %v476 = vunpack.c.h.b16 %v95
  %v477 = vunpack.c.l.b16 %v96
  %v478 = vunpack.c.h.b16 %v96
  %v479 = vunpack.c.l.b16 %v97
  %v480 = vunpack.c.h.b16 %v97
  %v481 = vunpack.c.l.b16 %v98
  %v482 = vunpack.c.h.b16 %v98
  %v483 = vunpack.c.l.b16 %v99
  %v484 = vunpack.c.h.b16 %v99
  %v485 = vunpack.c.l.b16 %v100
  %v486 = vunpack.c.h.b16 %v100
  %v487 = vunpack.c.l.b16 %v101
  %v488 = vunpack.c.h.b16 %v101
  %v489 = vunpack.c.l.b16 %v102
  %v490 = vunpack.c.h.b16 %v102
  %v491 = vunpack.c.l.b16 %v103
  %v492 = vunpack.c.h.b16 %v103
  %v493 = vunpack.c.l.b16 %v104
  %v494 = vunpack.c.h.b16 %v104
  %v495 = vunpack.c.l.b16 %v105
  %v496 = vunpack.c.h.b16 %v105
  %v497 = vunpack.c.l.b16 %v106
  %v498 = vunpack.c.h.b16 %v106
  %v499 = vunpack.c.l.b16 %v107
  %v500 = vunpack.c.h.b16 %v107
  %v501 = vunpack.c.l.b16 %v108
  %v502 = vunpack.c.h.b16 %v108
  %v503 = vunpack.c.l.b16 %v109
  %v504 = vunpack.c.h.b16 %v109
  %v505 = vunpack.c.l.b16 %v110
  %v506 = vunpack.c.h.b16 %v110
  %v507 = vunpack.c.l.b16 %v111
  %v508 = vunpack.c.h.b16 %v111
  %v509 = vunpack.c.l.b16 %v112
  %v510 = vunpack.c.h.b16 %v112
  %v511 = vunpack.c.l.b16 %v113
  %v512 = vunpack.c.h.b16 %v113
  %v513 = vunpack.c.l.b16 %v114
  %v514 = vunpack.c.h.b16 %v114
  %v515 = vunpack.c.l.b16 %v115
  %v516 = vunpack.c.h.b16 %v115
  %v517 = vunpack.c.l.b16 %v116
  %v518 = vunpack.c.h.b16 %v116
  %v519 = vunpack.c.l.b16 %v117
  %v520 = vunpack.c.h.b16 %v117
  %v521 = vunpack.c.l.b16 %v118
  %v522 = vunpack.c.h.b16 %v118
  %v523 = vunpack.c.l.b16 %v119
  %v524 = vunpack.c.h.b16 %v119
  %v525 = vunpack.c.l.b16 %v120
  %v526 = vunpack.c.h.b16 %v120
  %v527 = vunpack.c.l.b16 %v121
  %v528 = vunpack.c.h.b16 %v121
  %v529 = vunpack.c.l.b16 %v122
  %v530 = vunpack.c.h.b16 %v122
  %v531 = vunpack.c.l.b16 %v123
  %v532 = vunpack.c.h.b16 %v123
  %v533 = vunpack.c.l.b16 %v124
  %v534 = vunpack.c.h.b16 %v124
  %v535 = vunpack.c.l.b16 %v125
  %v536 = vunpack.c.h.b16 %v125
  %v537 = vunpack.c.l.b16 %v126
  %v538 = vunpack.c.h.b16 %v126
  %v539 = vunpack.c.l.b16 %v127
  %v540 = vunpack.c.h.b16 %v127
  %v541 = vunpack.c.l.b16 %v128
  %v542 = vunpack.c.h.b16 %v128
  %v543 = vunpack.c.l.b16 %v129
  %v544 = vunpack.c.h.b16 %v129
  %v545 = vunpack.c.l.b16 %v130
  %v546 = vunpack.c.h.b16 %v130
  %v547 = vunpack.c.l.b16 %v131
  %v548 = vunpack.c.h.b16 %v131
  %v549 = vunpack.c.l.b16 %v132
  %v550 = vunpack.c.h.b16 %v132
  %v551 = vunpack.c.l.b16 %v133
  %v552 = vunpack.c.h.b16 %v133
  %v553 = vunpack.c.l.b16 %v134
  %v554 = vunpack.c.h.b16 %v134
  %v555 = vunpack.c.l.b16 %v135
  %v556 = vunpack.c.h.b16 %v135
  %v557 = vunpack.c.l.b16 %v136
  %v558 = vunpack.c.h.b16 %v136
  %v559 = vunpack.c.l.b16 %v137
  %v560 = vunpack.c.h.b16 %v137
  %v561 = vunpack.c.l.b16 %v138
  %v562 = vunpack.c.h.b16 %v138
  %v563 = vunpack.c.l.b16 %v139
  %v564 = vunpack.c.h.b16 %v139
  %v565 = vunpack.c.l.b16 %v140
  %v566 = vunpack.c.h.b16 %v140
  %v567 = vunpack.c.l.b16 %v141
  %v568 = vunpack.c.h.b16 %v141
  %v569 = vunpack.c.l.b16 %v142
  %v570 = vunpack.c.h.b16 %v142
  %v571 = vunpack.c.l.b16 %v143
  %v572 = vunpack.c.h.b16 %v143
  %v573 = vunpack.c.l.b16 %v144
  %v574 = vunpack.c.h.b16 %v144
  %v575 = vunpack.c.l.b16 %v145
  %v576 = vunpack.c.h.b16 %v145
  %v577 = vunpack.c.l.b16 %v146
  %v578 = vunpack.c.h.b16 %v146
  %v579 = vunpack.c.l.b16 %v147
  %v580 = vunpack.c.h.b16 %v147
  %v581 = vunpack.c.l.b16 %v148
  %v582 = vunpack.c.h.b16 %v148
  %v583 = vunpack.c.l.b16 %v149
  %v584 = vunpack.c.h.b16 %v149
  %v585 = vunpack.c.l.b16 %v150
  %v586 = vunpack.c.h.b16 %v150
  %v587 = vpack.c.b16 %v339, %v331
  %v588 = vpack.c.b16 %v340, %v332
  %v589 = vpack.c.b16 %v341, %v333
  %v590 = vpack.c.b16 %v342, %v334
  %v591 = vpack.c.b16 %v343, %v335
  %v592 = vpack.c.b16 %v344, %v336
  %v593 = vpack.c.b16 %v345, %v337
  %v594 = vpack.c.b16 %v346, %v338
  %v595 = vpack.c.b16 %v355, %v347
  %v596 = vpack.c.b16 %v356, %v348
  %v597 = vpack.c.b16 %v357, %v349
  %v598 = vpack.c.b16 %v358, %v350
  %v599 = vpack.c.b16 %v359, %v351
  %v600 = vpack.c.b16 %v360, %v352
  %v601 = vpack.c.b16 %v361, %v353
  %v602 = vpack.c.b16 %v362, %v354
  %v603 = vpack.c.b16 %v371, %v363
  %v604 = vpack.c.b16 %v372, %v364
  %v605 = vpack.c.b16 %v373, %v365
  %v606 = vpack.c.b16 %v374, %v366
  %v607 = vpack.c.b16 %v375, %v367
  %v608 = vpack.c.b16 %v376, %v368
  %v609 = vpack.c.b16 %v377, %v369
  %v610 = vpack.c.b16 %v378, %v370
  %v611 = vpack.c.b16 %v387, %v379
  %v612 = vpack.c.b16 %v388, %v380
  %v613 = vpack.c.b16 %v389, %v381
  %v614 = vpack.c.b16 %v390, %v382
  %v615 = vpack.c.b16 %v391, %v383
  %v616 = vpack.c.b16 %v392, %v384
  %v617 = vpack.c.b16 %v393, %v385
  %v618 = vpack.c.b16 %v394, %v386
  %v619 = vpack.c.b16 %v403, %v395
  %v620 = vpack.c.b16 %v404, %v396
  %v621 = vpack.c.b16 %v405, %v397
  %v622 = vpack.c.b16 %v406, %v398
  %v623 = vpack.c.b16 %v407, %v399
  %v624 = vpack.c.b16 %v408, %v400
  %v625 = vpack.c.b16 %v409, %v401
  %v626 = vpack.c.b16 %v410, %v402
  %v627 = vpack.c.b16 %v419, %v411
  %v628 = vpack.c.b16 %v420, %v412
  %v629 = vpack.c.b16 %v421, %v413
  %v630 = vpack.c.b16 %v422, %v414
  %v631 = vpack.c.b16 %v423, %v415
  %v632 = vpack.c.b16 %v424, %v416
  %v633 = vpack.c.b16 %v425, %v417
  %v634 = vpack.c.b16 %v426, %v418
  %v635 = vpack.c.b16 %v435, %v427
  %v636 = vpack.c.b16 %v436, %v428
  %v637 = vpack.c.b16 %v437, %v429
  %v638 = vpack.c.b16 %v438, %v430
  %v639 = vpack.c.b16 %v439, %v431
  %v640 = vpack.c.b16 %v440, %v432
  %v641 = vpack.c.b16 %v441, %v433
  %v642 = vpack.c.b16 %v442, %v434
  %v643 = vpack.c.b16 %v451, %v443
  %v644 = vpack.c.b16 %v452, %v444
  %v645 = vpack.c.b16 %v453, %v445
  %v646 = vpack.c.b16 %v454, %v446
  %v647 = vpack.c.b16 %v455, %v447
  %v648 = vpack.c.b16 %v456, %v448
  %v649 = vpack.c.b16 %v457, %v449
  %v650 = vpack.c.b16 %v458, %v450
  %v651 = vpack.c.b16 %v467, %v459
  %v652 = vpack.c.b16 %v468, %v460
  %v653 = vpack.c.b16 %v469, %v461
  %v654 = vpack.c.b16 %v470, %v462
  %v655 = vpack.c.b16 %v471, %v463
  %v656 = vpack.c.b16 %v472, %v464
  %v657 = vpack.c.b16 %v473, %v465
  %v658 = vpack.c.b16 %v474, %v466
  %v659 = vpack.c.b16 %v483, %v475
  %v660 = vpack.c.b16 %v484, %v476
  %v661 = vpack.c.b16 %v485, %v477
  %v662 = vpack.c.b16 %v486, %v478
  %v663 = vpack.c.b16 %v487, %v479
  %v664 = vpack.c.b16 %v488, %v480
  %v665 = vpack.c.b16 %v489, %v481
  %v666 = vpack.c.b16 %v490, %v482
  %v667 = vpack.c.b16 %v499, %v491
  %v668 = vpack.c.b16 %v500, %v492
  %v669 = vpack.c.b16 %v501, %v493
  %v670 = vpack.c.b16 %v502, %v494
  %v671 = vpack.c.b16 %v503, %v495
  %v672 = vpack.c.b16 %v504, %v496
  %v673 = vpack.c.b16 %v505, %v497
  %v674 = vpack.c.b16 %v506, %v498
  %v675 = vpack.c.b16 %v515, %v507
  %v676 = vpack.c.b16 %v516, %v508
  %v677 = vpack.c.b16 %v517, %v509
  %v678 = vpack.c.b16 %v518, %v510
  %v679 = vpack.c.b16 %v519, %v511
  %v680 = vpack.c.b16 %v520, %v512
  %v681 = vpack.c.b16 %v521, %v513
  %v682 = vpack.c.b16 %v522, %v514
  %v683 = vpack.c.b16 %v531, %v523
  %v684 = vpack.c.b16 %v532, %v524
  %v685 = vpack.c.b16 %v533, %v525
  %v686 = vpack.c.b16 %v534, %v526
  %v687 = vpack.c.b16 %v535, %v527
  %v688 = vpack.c.b16 %v536, %v528
  %v689 = vpack.c.b16 %v537, %v529
  %v690 = vpack.c.b16 %v538, %v530
  %v691 = vpack.c.b16 %v547, %v539
  %v692 = vpack.c.b16 %v548, %v540
  %v693 = vpack.c.b16 %v549, %v541
  %v694 = vpack.c.b16 %v550, %v542
  %v695 = vpack.c.b16 %v551, %v543
  %v696 = vpack.c.b16 %v552, %v544
  %v697 = vpack.c.b16 %v553, %v545
  %v698 = vpack.c.b16 %v554, %v546
  %v699 = vpack.c.b16 %v563, %v555
  %v700 = vpack.c.b16 %v564, %v556
  %v701 = vpack.c.b16 %v565, %v557
  %v702 = vpack.c.b16 %v566, %v558
  %v703 = vpack.c.b16 %v567, %v559
  %v704 = vpack.c.b16 %v568, %v560
  %v705 = vpack.c.b16 %v569, %v561
  %v706 = vpack.c.b16 %v570, %v562
  %v707 = vpack.c.b16 %v579, %v571
  %v708 = vpack.c.b16 %v580, %v572
  %v709 = vpack.c.b16 %v581, %v573
  %v710 = vpack.c.b16 %v582, %v574
  %v711 = vpack.c.b16 %v583, %v575
  %v712 = vpack.c.b16 %v584, %v576
  %v713 = vpack.c.b16 %v585, %v577
  %v714 = vpack.c.b16 %v586, %v578
  %843 = vmatprep.subr.bf16.mxu0 %v644
  %844 = vmatpush1.bf16.msra.mxu0 %v643
  %845 = vmatprep.subr.bf16.mxu0 %v636
  %846 = vmatpush1.bf16.msra.mxu0 %v635
  %847 = vmatprep.subr.bf16.mxu0 %v628
  %848 = vmatpush1.bf16.msra.mxu0 %v627
  %849 = vmatprep.subr.bf16.mxu0 %v620
  %850 = vmatpush1.bf16.msra.mxu0 %v619
  %851 = vmatprep.subr.bf16.mxu0 %v612
  %852 = vmatpush1.bf16.msra.mxu0 %v611
  %853 = vmatprep.subr.bf16.mxu0 %v604
  %854 = vmatpush1.bf16.msra.mxu0 %v603
  %855 = vmatprep.subr.bf16.mxu0 %v596
  %856 = vmatpush1.bf16.msra.mxu0 %v595
  %857 = vmatprep.subr.bf16.mxu0 %v588
  %858 = vmatpush1.bf16.msra.mxu0 %v587
  %859 = vmatprep.subr.bf16.mxu0 %v708
  %860 = vmatpush2.bf16.msra.mxu0 %v707
  %861 = vmatprep.subr.bf16.mxu0 %v700
  %862 = vmatpush2.bf16.msra.mxu0 %v699
  %863 = vmatprep.subr.bf16.mxu0 %v692
  %864 = vmatpush2.bf16.msra.mxu0 %v691
  %865 = vmatprep.subr.bf16.mxu0 %v684
  %866 = vmatpush2.bf16.msra.mxu0 %v683
  %867 = vmatprep.subr.bf16.mxu0 %v676
  %868 = vmatpush2.bf16.msra.mxu0 %v675
  %869 = vmatprep.subr.bf16.mxu0 %v668
  %870 = vmatpush2.bf16.msra.mxu0 %v667
  %871 = vmatprep.subr.bf16.mxu0 %v660
  %872 = vmatpush2.bf16.msra.mxu0 %v659
  %873 = vmatprep.subr.bf16.mxu0 %v652
  %874 = vmatpush2.bf16.msra.mxu0 %v651
  %875 = vmatprep.mubr.bf16.mxu0 %v200
  %876 = vmatmul.mubr.bf16.gmra.mxu0 %v199
  %v877 = vpop.f32.mrf.mxu0
  %v878 = vadd.f32 %v156, %v877
  %v879 = vpop.f32.mrf.mxu0
  %v880 = vadd.f32 %v160, %v879
  %v881 = vpop.f32.mrf.mxu0
  %v882 = vadd.f32 %v156, %v881
  %v883 = vpop.f32.mrf.mxu0
  %v884 = vadd.f32 %v160, %v883
  %885 = vdwg.mxu0
  %886 = vmatprep.subr.bf16.mxu0 %v646
  %887 = vmatpush1.bf16.msra.mxu0 %v645
  %888 = vmatprep.subr.bf16.mxu0 %v638
  %889 = vmatpush1.bf16.msra.mxu0 %v637
  %890 = vmatprep.subr.bf16.mxu0 %v630
  %891 = vmatpush1.bf16.msra.mxu0 %v629
  %892 = vmatprep.subr.bf16.mxu0 %v622
  %893 = vmatpush1.bf16.msra.mxu0 %v621
  %894 = vmatprep.subr.bf16.mxu0 %v614
  %895 = vmatpush1.bf16.msra.mxu0 %v613
  %896 = vmatprep.subr.bf16.mxu0 %v606
  %897 = vmatpush1.bf16.msra.mxu0 %v605
  %898 = vmatprep.subr.bf16.mxu0 %v598
  %899 = vmatpush1.bf16.msra.mxu0 %v597
  %900 = vmatprep.subr.bf16.mxu0 %v590
  %901 = vmatpush1.bf16.msra.mxu0 %v589
  %902 = vmatprep.subr.bf16.mxu0 %v710
  %903 = vmatpush2.bf16.msra.mxu0 %v709
  %904 = vmatprep.subr.bf16.mxu0 %v702
  %905 = vmatpush2.bf16.msra.mxu0 %v701
  %906 = vmatprep.subr.bf16.mxu0 %v694
  %907 = vmatpush2.bf16.msra.mxu0 %v693
  %908 = vmatprep.subr.bf16.mxu0 %v686
  %909 = vmatpush2.bf16.msra.mxu0 %v685
  %910 = vmatprep.subr.bf16.mxu0 %v678
  %911 = vmatpush2.bf16.msra.mxu0 %v677
  %912 = vmatprep.subr.bf16.mxu0 %v670
  %913 = vmatpush2.bf16.msra.mxu0 %v669
  %914 = vmatprep.subr.bf16.mxu0 %v662
  %915 = vmatpush2.bf16.msra.mxu0 %v661
  %916 = vmatprep.subr.bf16.mxu0 %v654
  %917 = vmatpush2.bf16.msra.mxu0 %v653
  %918 = vmatprep.mubr.bf16.mxu0 %v200
  %919 = vmatmul.mubr.bf16.gmra.mxu0 %v199
  %v920 = vpop.f32.mrf.mxu0
  %v921 = vadd.f32 %v164, %v920
  %v922 = vpop.f32.mrf.mxu0
  %v923 = vadd.f32 %v168, %v922
  %v924 = vpop.f32.mrf.mxu0
  %v925 = vadd.f32 %v164, %v924
  %v926 = vpop.f32.mrf.mxu0
  %v927 = vadd.f32 %v168, %v926
  %928 = vdwg.mxu0
  %929 = vmatprep.subr.bf16.mxu0 %v648
  %930 = vmatpush1.bf16.msra.mxu0 %v647
  %931 = vmatprep.subr.bf16.mxu0 %v640
  %932 = vmatpush1.bf16.msra.mxu0 %v639
  %933 = vmatprep.subr.bf16.mxu0 %v632
  %934 = vmatpush1.bf16.msra.mxu0 %v631
  %935 = vmatprep.subr.bf16.mxu0 %v624
  %936 = vmatpush1.bf16.msra.mxu0 %v623
  %937 = vmatprep.subr.bf16.mxu0 %v616
  %938 = vmatpush1.bf16.msra.mxu0 %v615
  %939 = vmatprep.subr.bf16.mxu0 %v608
  %940 = vmatpush1.bf16.msra.mxu0 %v607
  %941 = vmatprep.subr.bf16.mxu0 %v600
  %942 = vmatpush1.bf16.msra.mxu0 %v599
  %943 = vmatprep.subr.bf16.mxu0 %v592
  %944 = vmatpush1.bf16.msra.mxu0 %v591
  %945 = vmatprep.subr.bf16.mxu0 %v712
  %946 = vmatpush2.bf16.msra.mxu0 %v711
  %947 = vmatprep.subr.bf16.mxu0 %v704
  %948 = vmatpush2.bf16.msra.mxu0 %v703
  %949 = vmatprep.subr.bf16.mxu0 %v696
  %950 = vmatpush2.bf16.msra.mxu0 %v695
  %951 = vmatprep.subr.bf16.mxu0 %v688
  %952 = vmatpush2.bf16.msra.mxu0 %v687
  %953 = vmatprep.subr.bf16.mxu0 %v680
  %954 = vmatpush2.bf16.msra.mxu0 %v679
  %955 = vmatprep.subr.bf16.mxu0 %v672
  %956 = vmatpush2.bf16.msra.mxu0 %v671
  %957 = vmatprep.subr.bf16.mxu0 %v664
  %958 = vmatpush2.bf16.msra.mxu0 %v663
  %959 = vmatprep.subr.bf16.mxu0 %v656
  %960 = vmatpush2.bf16.msra.mxu0 %v655
  %961 = vmatprep.mubr.bf16.mxu0 %v200
  %962 = vmatmul.mubr.bf16.gmra.mxu0 %v199
  %v963 = vpop.f32.mrf.mxu0
  %v964 = vadd.f32 %v172, %v963
  %v965 = vpop.f32.mrf.mxu0
  %v966 = vadd.f32 %v176, %v965
  %v967 = vpop.f32.mrf.mxu0
  %v968 = vadd.f32 %v172, %v967
  %v969 = vpop.f32.mrf.mxu0
  %v970 = vadd.f32 %v176, %v969
  %971 = vdwg.mxu0
  %972 = vmatprep.subr.bf16.mxu0 %v650
  %973 = vmatpush1.bf16.msra.mxu0 %v649
  %974 = vmatprep.subr.bf16.mxu0 %v642
  %975 = vmatpush1.bf16.msra.mxu0 %v641
  %976 = vmatprep.subr.bf16.mxu0 %v634
  %977 = vmatpush1.bf16.msra.mxu0 %v633
  %978 = vmatprep.subr.bf16.mxu0 %v626
  %979 = vmatpush1.bf16.msra.mxu0 %v625
  %980 = vmatprep.subr.bf16.mxu0 %v618
  %981 = vmatpush1.bf16.msra.mxu0 %v617
  %982 = vmatprep.subr.bf16.mxu0 %v610
  %983 = vmatpush1.bf16.msra.mxu0 %v609
  %984 = vmatprep.subr.bf16.mxu0 %v602
  %985 = vmatpush1.bf16.msra.mxu0 %v601
  %986 = vmatprep.subr.bf16.mxu0 %v594
  %987 = vmatpush1.bf16.msra.mxu0 %v593
  %988 = vmatprep.subr.bf16.mxu0 %v714
  %989 = vmatpush2.bf16.msra.mxu0 %v713
  %990 = vmatprep.subr.bf16.mxu0 %v706
  %991 = vmatpush2.bf16.msra.mxu0 %v705
  %992 = vmatprep.subr.bf16.mxu0 %v698
  %993 = vmatpush2.bf16.msra.mxu0 %v697
  %994 = vmatprep.subr.bf16.mxu0 %v690
  %995 = vmatpush2.bf16.msra.mxu0 %v689
  %996 = vmatprep.subr.bf16.mxu0 %v682
  %997 = vmatpush2.bf16.msra.mxu0 %v681
  %998 = vmatprep.subr.bf16.mxu0 %v674
  %999 = vmatpush2.bf16.msra.mxu0 %v673
  %1000 = vmatprep.subr.bf16.mxu0 %v666
  %1001 = vmatpush2.bf16.msra.mxu0 %v665
  %1002 = vmatprep.subr.bf16.mxu0 %v658
  %1003 = vmatpush2.bf16.msra.mxu0 %v657
  %1004 = vmatprep.mubr.bf16.mxu0 %v200
  %1005 = vmatmul.mubr.bf16.gmra.mxu0 %v199
  %v1006 = vpop.f32.mrf.mxu0
  %v1007 = vadd.f32 %v180, %v1006
  %v1008 = vpop.f32.mrf.mxu0
  %v1009 = vadd.f32 %v184, %v1008
  %v1010 = vpop.f32.mrf.mxu0
  %v1011 = vadd.f32 %v180, %v1010
  %v1012 = vpop.f32.mrf.mxu0
  %v1013 = vadd.f32 %v184, %v1012
  %1014 = vdwg.mxu0
  %v1015 = vmax.f32 %v878, 0.0
  %v1016 = vmax.f32 %v880, 0.0
  %v1017 = vmax.f32 %v921, 0.0
  %v1018 = vmax.f32 %v923, 0.0
  %v1019 = vmax.f32 %v964, 0.0
  %v1020 = vmax.f32 %v966, 0.0
  %v1021 = vmax.f32 %v1007, 0.0
  %v1022 = vmax.f32 %v1009, 0.0
  %v1023 = vmax.f32 %v882, 0.0
  %v1024 = vmax.f32 %v884, 0.0
  %v1025 = vmax.f32 %v925, 0.0
  %v1026 = vmax.f32 %v927, 0.0
  %v1027 = vmax.f32 %v968, 0.0
  %v1028 = vmax.f32 %v970, 0.0
  %v1029 = vmax.f32 %v1011, 0.0
  %v1030 = vmax.f32 %v1013, 0.0
  %v1031 = vpack.c.bf16 %v1023, %v1015
  %v1032 = vpack.c.bf16 %v1024, %v1016
  %v1033 = vpack.c.bf16 %v1025, %v1017
  %v1034 = vpack.c.bf16 %v1026, %v1018
  %v1035 = vpack.c.bf16 %v1027, %v1019
  %v1036 = vpack.c.bf16 %v1028, %v1020
  %v1037 = vpack.c.bf16 %v1029, %v1021
  %v1038 = vpack.c.bf16 %v1030, %v1022
  %v1039 = vld [vmem:[%s3] sm:$0xf]
  %v1040 = vld [vmem:[%s3 + $0x4] sm:$0xf]
  %v1041 = vld [vmem:[%s3 + $0x8] sm:$0xf]
  %v1042 = vld [vmem:[%s3 + $0xc] sm:$0xf]
  %v1043 = vld [vmem:[%s3 + $0x10] sm:$0xf]
  %v1044 = vld [vmem:[%s3 + $0x14] sm:$0xf]
  %v1045 = vld [vmem:[%s3 + $0x18] sm:$0xf]
  %v1046 = vld [vmem:[%s3 + $0x1c] sm:$0xf]
  %v1047 = vld [vmem:[%s3 + $0x20] sm:$0xf]
  %v1048 = vld [vmem:[%s3 + $0x24] sm:$0xf]
  %v1049 = vld [vmem:[%s3 + $0x28] sm:$0xf]
  %v1050 = vld [vmem:[%s3 + $0x2c] sm:$0xf]
  %v1051 = vld [vmem:[%s3 + $0x30] sm:$0xf]
  %v1052 = vld [vmem:[%s3 + $0x34] sm:$0xf]
  %v1053 = vld [vmem:[%s3 + $0x38] sm:$0xf]
  %v1054 = vld [vmem:[%s3 + $0x3c] sm:$0xf]
  %v1055 = vld [vmem:[%s3 + $0x40] sm:$0xf]
  %v1056 = vld [vmem:[%s3 + $0x44] sm:$0xf]
  %v1057 = vld [vmem:[%s3 + $0x48] sm:$0xf]
  %v1058 = vld [vmem:[%s3 + $0x4c] sm:$0xf]
  %v1059 = vld [vmem:[%s3 + $0x50] sm:$0xf]
  %v1060 = vld [vmem:[%s3 + $0x54] sm:$0xf]
  %v1061 = vld [vmem:[%s3 + $0x58] sm:$0xf]
  %v1062 = vld [vmem:[%s3 + $0x5c] sm:$0xf]
  %v1063 = vld [vmem:[%s3 + $0x60] sm:$0xf]
  %v1064 = vld [vmem:[%s3 + $0x64] sm:$0xf]
  %v1065 = vld [vmem:[%s3 + $0x68] sm:$0xf]
  %v1066 = vld [vmem:[%s3 + $0x6c] sm:$0xf]
  %v1067 = vld [vmem:[%s3 + $0x70] sm:$0xf]
  %v1068 = vld [vmem:[%s3 + $0x74] sm:$0xf]
  %v1069 = vld [vmem:[%s3 + $0x78] sm:$0xf]
  %v1070 = vld [vmem:[%s3 + $0x7c] sm:$0xf]
  %v1071 = vld [vmem:[%s3 + $0x80] sm:$0xf]
  %v1072 = vld [vmem:[%s3 + $0x84] sm:$0xf]
  %v1073 = vld [vmem:[%s3 + $0x88] sm:$0xf]
  %v1074 = vld [vmem:[%s3 + $0x8c] sm:$0xf]
  %v1075 = vld [vmem:[%s3 + $0x90] sm:$0xf]
  %v1076 = vld [vmem:[%s3 + $0x94] sm:$0xf]
  %v1077 = vld [vmem:[%s3 + $0x98] sm:$0xf]
  %v1078 = vld [vmem:[%s3 + $0x9c] sm:$0xf]
  %v1079 = vld [vmem:[%s3 + $0xa0] sm:$0xf]
  %v1080 = vld [vmem:[%s3 + $0xa4] sm:$0xf]
  %v1081 = vld [vmem:[%s3 + $0xa8] sm:$0xf]
  %v1082 = vld [vmem:[%s3 + $0xac] sm:$0xf]
  %v1083 = vld [vmem:[%s3 + $0xb0] sm:$0xf]
  %v1084 = vld [vmem:[%s3 + $0xb4] sm:$0xf]
  %v1085 = vld [vmem:[%s3 + $0xb8] sm:$0xf]
  %v1086 = vld [vmem:[%s3 + $0xbc] sm:$0xf]
  %v1087 = vld [vmem:[%s3 + $0xc0] sm:$0xf]
  %v1088 = vld [vmem:[%s3 + $0xc4] sm:$0xf]
  %v1089 = vld [vmem:[%s3 + $0xc8] sm:$0xf]
  %v1090 = vld [vmem:[%s3 + $0xcc] sm:$0xf]
  %v1091 = vld [vmem:[%s3 + $0xd0] sm:$0xf]
  %v1092 = vld [vmem:[%s3 + $0xd4] sm:$0xf]
  %v1093 = vld [vmem:[%s3 + $0xd8] sm:$0xf]
  %v1094 = vld [vmem:[%s3 + $0xdc] sm:$0xf]
  %v1095 = vld [vmem:[%s3 + $0xe0] sm:$0xf]
  %v1096 = vld [vmem:[%s3 + $0xe4] sm:$0xf]
  %v1097 = vld [vmem:[%s3 + $0xe8] sm:$0xf]
  %v1098 = vld [vmem:[%s3 + $0xec] sm:$0xf]
  %v1099 = vld [vmem:[%s3 + $0xf0] sm:$0xf]
  %v1100 = vld [vmem:[%s3 + $0xf4] sm:$0xf]
  %v1101 = vld [vmem:[%s3 + $0xf8] sm:$0xf]
  %v1102 = vld [vmem:[%s3 + $0xfc] sm:$0xf]
  %v1103 = vld [vmem:[%s3 + $0x100] sm:$0xf]
  %v1104 = vld [vmem:[%s3 + $0x104] sm:$0xf]
  %v1105 = vld [vmem:[%s3 + $0x108] sm:$0xf]
  %v1106 = vld [vmem:[%s3 + $0x10c] sm:$0xf]
  %v1107 = vld [vmem:[%s3 + $0x110] sm:$0xf]
  %v1108 = vld [vmem:[%s3 + $0x114] sm:$0xf]
  %v1109 = vld [vmem:[%s3 + $0x118] sm:$0xf]
  %v1110 = vld [vmem:[%s3 + $0x11c] sm:$0xf]
  %v1111 = vld [vmem:[%s3 + $0x120] sm:$0xf]
  %v1112 = vld [vmem:[%s3 + $0x124] sm:$0xf]
  %v1113 = vld [vmem:[%s3 + $0x128] sm:$0xf]
  %v1114 = vld [vmem:[%s3 + $0x12c] sm:$0xf]
  %v1115 = vld [vmem:[%s3 + $0x130] sm:$0xf]
  %v1116 = vld [vmem:[%s3 + $0x134] sm:$0xf]
  %v1117 = vld [vmem:[%s3 + $0x138] sm:$0xf]
  %v1118 = vld [vmem:[%s3 + $0x13c] sm:$0xf]
  %v1119 = vld [vmem:[%s3 + $0x140] sm:$0xf]
  %v1120 = vld [vmem:[%s3 + $0x144] sm:$0xf]
  %v1121 = vld [vmem:[%s3 + $0x148] sm:$0xf]
  %v1122 = vld [vmem:[%s3 + $0x14c] sm:$0xf]
  %v1123 = vld [vmem:[%s3 + $0x150] sm:$0xf]
  %v1124 = vld [vmem:[%s3 + $0x154] sm:$0xf]
  %v1125 = vld [vmem:[%s3 + $0x158] sm:$0xf]
  %v1126 = vld [vmem:[%s3 + $0x15c] sm:$0xf]
  %v1127 = vld [vmem:[%s3 + $0x160] sm:$0xf]
  %v1128 = vld [vmem:[%s3 + $0x164] sm:$0xf]
  %v1129 = vld [vmem:[%s3 + $0x168] sm:$0xf]
  %v1130 = vld [vmem:[%s3 + $0x16c] sm:$0xf]
  %v1131 = vld [vmem:[%s3 + $0x170] sm:$0xf]
  %v1132 = vld [vmem:[%s3 + $0x174] sm:$0xf]
  %v1133 = vld [vmem:[%s3 + $0x178] sm:$0xf]
  %v1134 = vld [vmem:[%s3 + $0x17c] sm:$0xf]
  %v1135 = vld [vmem:[%s3 + $0x180] sm:$0xf]
  %v1136 = vld [vmem:[%s3 + $0x184] sm:$0xf]
  %v1137 = vld [vmem:[%s3 + $0x188] sm:$0xf]
  %v1138 = vld [vmem:[%s3 + $0x18c] sm:$0xf]
  %v1139 = vld [vmem:[%s3 + $0x190] sm:$0xf]
  %v1140 = vld [vmem:[%s3 + $0x194] sm:$0xf]
  %v1141 = vld [vmem:[%s3 + $0x198] sm:$0xf]
  %v1142 = vld [vmem:[%s3 + $0x19c] sm:$0xf]
  %v1143 = vld [vmem:[%s3 + $0x1a0] sm:$0xf]
  %v1144 = vld [vmem:[%s3 + $0x1a4] sm:$0xf]
  %v1145 = vld [vmem:[%s3 + $0x1a8] sm:$0xf]
  %v1146 = vld [vmem:[%s3 + $0x1ac] sm:$0xf]
  %v1147 = vld [vmem:[%s3 + $0x1b0] sm:$0xf]
  %v1148 = vld [vmem:[%s3 + $0x1b4] sm:$0xf]
  %v1149 = vld [vmem:[%s3 + $0x1b8] sm:$0xf]
  %v1150 = vld [vmem:[%s3 + $0x1bc] sm:$0xf]
  %v1151 = vld [vmem:[%s3 + $0x1c0] sm:$0xf]
  %v1152 = vld [vmem:[%s3 + $0x1c4] sm:$0xf]
  %v1153 = vld [vmem:[%s3 + $0x1c8] sm:$0xf]
  %v1154 = vld [vmem:[%s3 + $0x1cc] sm:$0xf]
  %v1155 = vld [vmem:[%s3 + $0x1d0] sm:$0xf]
  %v1156 = vld [vmem:[%s3 + $0x1d4] sm:$0xf]
  %v1157 = vld [vmem:[%s3 + $0x1d8] sm:$0xf]
  %v1158 = vld [vmem:[%s3 + $0x1dc] sm:$0xf]
  %v1159 = vld [vmem:[%s3 + $0x1e0] sm:$0xf]
  %v1160 = vld [vmem:[%s3 + $0x1e4] sm:$0xf]
  %v1161 = vld [vmem:[%s3 + $0x1e8] sm:$0xf]
  %v1162 = vld [vmem:[%s3 + $0x1ec] sm:$0xf]
  %v1163 = vld [vmem:[%s3 + $0x1f0] sm:$0xf]
  %v1164 = vld [vmem:[%s3 + $0x1f4] sm:$0xf]
  %v1165 = vld [vmem:[%s3 + $0x1f8] sm:$0xf]
  %v1166 = vld [vmem:[%s3 + $0x1fc] sm:$0xf]
  %v1167 = vld [vmem:[%s4] sm:$0x1]
  %v1169 = vlaneseq
  %v1170 = vshrl.u32 %v1169, 7
  %v1171 = vsub.s32 0, %v1170
  %v1172 = vrot.slane %v1167, %v1171
  %v1302 = vunpack.c.l.b16 %v1039
  %v1303 = vunpack.c.l.b16 %v1040
  %v1304 = vunpack.c.l.b16 %v1041
  %v1305 = vunpack.c.l.b16 %v1042
  %v1306 = vunpack.c.l.b16 %v1043
  %v1307 = vunpack.c.l.b16 %v1044
  %v1308 = vunpack.c.l.b16 %v1045
  %v1309 = vunpack.c.l.b16 %v1046
  %v1310 = vunpack.c.l.b16 %v1047
  %v1311 = vunpack.c.l.b16 %v1048
  %v1312 = vunpack.c.l.b16 %v1049
  %v1313 = vunpack.c.l.b16 %v1050
  %v1314 = vunpack.c.l.b16 %v1051
  %v1315 = vunpack.c.l.b16 %v1052
  %v1316 = vunpack.c.l.b16 %v1053
  %v1317 = vunpack.c.l.b16 %v1054
  %v1318 = vunpack.c.l.b16 %v1055
  %v1319 = vunpack.c.l.b16 %v1056
  %v1320 = vunpack.c.l.b16 %v1057
  %v1321 = vunpack.c.l.b16 %v1058
  %v1322 = vunpack.c.l.b16 %v1059
  %v1323 = vunpack.c.l.b16 %v1060
  %v1324 = vunpack.c.l.b16 %v1061
  %v1325 = vunpack.c.l.b16 %v1062
  %v1326 = vunpack.c.l.b16 %v1063
  %v1327 = vunpack.c.l.b16 %v1064
  %v1328 = vunpack.c.l.b16 %v1065
  %v1329 = vunpack.c.l.b16 %v1066
  %v1330 = vunpack.c.l.b16 %v1067
  %v1331 = vunpack.c.l.b16 %v1068
  %v1332 = vunpack.c.l.b16 %v1069
  %v1333 = vunpack.c.l.b16 %v1070
  %v1334 = vunpack.c.l.b16 %v1071
  %v1335 = vunpack.c.l.b16 %v1072
  %v1336 = vunpack.c.l.b16 %v1073
  %v1337 = vunpack.c.l.b16 %v1074
  %v1338 = vunpack.c.l.b16 %v1075
  %v1339 = vunpack.c.l.b16 %v1076
  %v1340 = vunpack.c.l.b16 %v1077
  %v1341 = vunpack.c.l.b16 %v1078
  %v1342 = vunpack.c.l.b16 %v1079
  %v1343 = vunpack.c.l.b16 %v1080
  %v1344 = vunpack.c.l.b16 %v1081
  %v1345 = vunpack.c.l.b16 %v1082
  %v1346 = vunpack.c.l.b16 %v1083
  %v1347 = vunpack.c.l.b16 %v1084
  %v1348 = vunpack.c.l.b16 %v1085
  %v1349 = vunpack.c.l.b16 %v1086
  %v1350 = vunpack.c.l.b16 %v1087
  %v1351 = vunpack.c.l.b16 %v1088
  %v1352 = vunpack.c.l.b16 %v1089
  %v1353 = vunpack.c.l.b16 %v1090
  %v1354 = vunpack.c.l.b16 %v1091
  %v1355 = vunpack.c.l.b16 %v1092
  %v1356 = vunpack.c.l.b16 %v1093
  %v1357 = vunpack.c.l.b16 %v1094
  %v1358 = vunpack.c.l.b16 %v1095
  %v1359 = vunpack.c.l.b16 %v1096
  %v1360 = vunpack.c.l.b16 %v1097
  %v1361 = vunpack.c.l.b16 %v1098
  %v1362 = vunpack.c.l.b16 %v1099
  %v1363 = vunpack.c.l.b16 %v1100
  %v1364 = vunpack.c.l.b16 %v1101
  %v1365 = vunpack.c.l.b16 %v1102
  %v1366 = vunpack.c.l.b16 %v1103
  %v1367 = vunpack.c.l.b16 %v1104
  %v1368 = vunpack.c.l.b16 %v1105
  %v1369 = vunpack.c.l.b16 %v1106
  %v1370 = vunpack.c.l.b16 %v1107
  %v1371 = vunpack.c.l.b16 %v1108
  %v1372 = vunpack.c.l.b16 %v1109
  %v1373 = vunpack.c.l.b16 %v1110
  %v1374 = vunpack.c.l.b16 %v1111
  %v1375 = vunpack.c.l.b16 %v1112
  %v1376 = vunpack.c.l.b16 %v1113
  %v1377 = vunpack.c.l.b16 %v1114
  %v1378 = vunpack.c.l.b16 %v1115
  %v1379 = vunpack.c.l.b16 %v1116
  %v1380 = vunpack.c.l.b16 %v1117
  %v1381 = vunpack.c.l.b16 %v1118
  %v1382 = vunpack.c.l.b16 %v1119
  %v1383 = vunpack.c.l.b16 %v1120
  %v1384 = vunpack.c.l.b16 %v1121
  %v1385 = vunpack.c.l.b16 %v1122
  %v1386 = vunpack.c.l.b16 %v1123
  %v1387 = vunpack.c.l.b16 %v1124
  %v1388 = vunpack.c.l.b16 %v1125
  %v1389 = vunpack.c.l.b16 %v1126
  %v1390 = vunpack.c.l.b16 %v1127
  %v1391 = vunpack.c.l.b16 %v1128
  %v1392 = vunpack.c.l.b16 %v1129
  %v1393 = vunpack.c.l.b16 %v1130
  %v1394 = vunpack.c.l.b16 %v1131
  %v1395 = vunpack.c.l.b16 %v1132
  %v1396 = vunpack.c.l.b16 %v1133
  %v1397 = vunpack.c.l.b16 %v1134
  %v1398 = vunpack.c.l.b16 %v1135
  %v1399 = vunpack.c.l.b16 %v1136
  %v1400 = vunpack.c.l.b16 %v1137
  %v1401 = vunpack.c.l.b16 %v1138
  %v1402 = vunpack.c.l.b16 %v1139
  %v1403 = vunpack.c.l.b16 %v1140
  %v1404 = vunpack.c.l.b16 %v1141
  %v1405 = vunpack.c.l.b16 %v1142
  %v1406 = vunpack.c.l.b16 %v1143
  %v1407 = vunpack.c.l.b16 %v1144
  %v1408 = vunpack.c.l.b16 %v1145
  %v1409 = vunpack.c.l.b16 %v1146
  %v1410 = vunpack.c.l.b16 %v1147
  %v1411 = vunpack.c.l.b16 %v1148
  %v1412 = vunpack.c.l.b16 %v1149
  %v1413 = vunpack.c.l.b16 %v1150
  %v1414 = vunpack.c.l.b16 %v1151
  %v1415 = vunpack.c.l.b16 %v1152
  %v1416 = vunpack.c.l.b16 %v1153
  %v1417 = vunpack.c.l.b16 %v1154
  %v1418 = vunpack.c.l.b16 %v1155
  %v1419 = vunpack.c.l.b16 %v1156
  %v1420 = vunpack.c.l.b16 %v1157
  %v1421 = vunpack.c.l.b16 %v1158
  %v1422 = vunpack.c.l.b16 %v1159
  %v1423 = vunpack.c.l.b16 %v1160
  %v1424 = vunpack.c.l.b16 %v1161
  %v1425 = vunpack.c.l.b16 %v1162
  %v1426 = vunpack.c.l.b16 %v1163
  %v1427 = vunpack.c.l.b16 %v1164
  %v1428 = vunpack.c.l.b16 %v1165
  %v1429 = vunpack.c.l.b16 %v1166
  %v1430 = vpack.c.b16 %v1303, %v1302
  %v1431 = vpack.c.b16 %v1305, %v1304
  %v1432 = vpack.c.b16 %v1307, %v1306
  %v1433 = vpack.c.b16 %v1309, %v1308
  %v1434 = vpack.c.b16 %v1311, %v1310
  %v1435 = vpack.c.b16 %v1313, %v1312
  %v1436 = vpack.c.b16 %v1315, %v1314
  %v1437 = vpack.c.b16 %v1317, %v1316
  %v1438 = vpack.c.b16 %v1319, %v1318
  %v1439 = vpack.c.b16 %v1321, %v1320
  %v1440 = vpack.c.b16 %v1323, %v1322
  %v1441 = vpack.c.b16 %v1325, %v1324
  %v1442 = vpack.c.b16 %v1327, %v1326
  %v1443 = vpack.c.b16 %v1329, %v1328
  %v1444 = vpack.c.b16 %v1331, %v1330
  %v1445 = vpack.c.b16 %v1333, %v1332
  %v1446 = vpack.c.b16 %v1335, %v1334
  %v1447 = vpack.c.b16 %v1337, %v1336
  %v1448 = vpack.c.b16 %v1339, %v1338
  %v1449 = vpack.c.b16 %v1341, %v1340
  %v1450 = vpack.c.b16 %v1343, %v1342
  %v1451 = vpack.c.b16 %v1345, %v1344
  %v1452 = vpack.c.b16 %v1347, %v1346
  %v1453 = vpack.c.b16 %v1349, %v1348
  %v1454 = vpack.c.b16 %v1351, %v1350
  %v1455 = vpack.c.b16 %v1353, %v1352
  %v1456 = vpack.c.b16 %v1355, %v1354
  %v1457 = vpack.c.b16 %v1357, %v1356
  %v1458 = vpack.c.b16 %v1359, %v1358
  %v1459 = vpack.c.b16 %v1361, %v1360
  %v1460 = vpack.c.b16 %v1363, %v1362
  %v1461 = vpack.c.b16 %v1365, %v1364
  %v1462 = vpack.c.b16 %v1367, %v1366
  %v1463 = vpack.c.b16 %v1369, %v1368
  %v1464 = vpack.c.b16 %v1371, %v1370
  %v1465 = vpack.c.b16 %v1373, %v1372
  %v1466 = vpack.c.b16 %v1375, %v1374
  %v1467 = vpack.c.b16 %v1377, %v1376
  %v1468 = vpack.c.b16 %v1379, %v1378
  %v1469 = vpack.c.b16 %v1381, %v1380
  %v1470 = vpack.c.b16 %v1383, %v1382
  %v1471 = vpack.c.b16 %v1385, %v1384
  %v1472 = vpack.c.b16 %v1387, %v1386
  %v1473 = vpack.c.b16 %v1389, %v1388
  %v1474 = vpack.c.b16 %v1391, %v1390
  %v1475 = vpack.c.b16 %v1393, %v1392
  %v1476 = vpack.c.b16 %v1395, %v1394
  %v1477 = vpack.c.b16 %v1397, %v1396
  %v1478 = vpack.c.b16 %v1399, %v1398
  %v1479 = vpack.c.b16 %v1401, %v1400
  %v1480 = vpack.c.b16 %v1403, %v1402
  %v1481 = vpack.c.b16 %v1405, %v1404
  %v1482 = vpack.c.b16 %v1407, %v1406
  %v1483 = vpack.c.b16 %v1409, %v1408
  %v1484 = vpack.c.b16 %v1411, %v1410
  %v1485 = vpack.c.b16 %v1413, %v1412
  %v1486 = vpack.c.b16 %v1415, %v1414
  %v1487 = vpack.c.b16 %v1417, %v1416
  %v1488 = vpack.c.b16 %v1419, %v1418
  %v1489 = vpack.c.b16 %v1421, %v1420
  %v1490 = vpack.c.b16 %v1423, %v1422
  %v1491 = vpack.c.b16 %v1425, %v1424
  %v1492 = vpack.c.b16 %v1427, %v1426
  %v1493 = vpack.c.b16 %v1429, %v1428
  %1558 = vmatprep.subr.bf16.mxu0 0
  %1559 = vmatpush1.bf16.msra.mxu0 %v1437
  %1560 = vmatprep.subr.bf16.mxu0 0
  %1561 = vmatpush1.bf16.msra.mxu0 %v1436
  %1562 = vmatprep.subr.bf16.mxu0 0
  %1563 = vmatpush1.bf16.msra.mxu0 %v1435
  %1564 = vmatprep.subr.bf16.mxu0 0
  %1565 = vmatpush1.bf16.msra.mxu0 %v1434
  %1566 = vmatprep.subr.bf16.mxu0 0
  %1567 = vmatpush1.bf16.msra.mxu0 %v1433
  %1568 = vmatprep.subr.bf16.mxu0 0
  %1569 = vmatpush1.bf16.msra.mxu0 %v1432
  %1570 = vmatprep.subr.bf16.mxu0 0
  %1571 = vmatpush1.bf16.msra.mxu0 %v1431
  %1572 = vmatprep.subr.bf16.mxu0 0
  %1573 = vmatpush1.bf16.msra.mxu0 %v1430
  %1574 = vmatprep.subr.bf16.mxu0 0
  %1575 = vmatpush2.bf16.msra.mxu0 %v1445
  %1576 = vmatprep.subr.bf16.mxu0 0
  %1577 = vmatpush2.bf16.msra.mxu0 %v1444
  %1578 = vmatprep.subr.bf16.mxu0 0
  %1579 = vmatpush2.bf16.msra.mxu0 %v1443
  %1580 = vmatprep.subr.bf16.mxu0 0
  %1581 = vmatpush2.bf16.msra.mxu0 %v1442
  %1582 = vmatprep.subr.bf16.mxu0 0
  %1583 = vmatpush2.bf16.msra.mxu0 %v1441
  %1584 = vmatprep.subr.bf16.mxu0 0
  %1585 = vmatpush2.bf16.msra.mxu0 %v1440
  %1586 = vmatprep.subr.bf16.mxu0 0
  %1587 = vmatpush2.bf16.msra.mxu0 %v1439
  %1588 = vmatprep.subr.bf16.mxu0 0
  %1589 = vmatpush2.bf16.msra.mxu0 %v1438
  %1590 = vmatprep.mubr.bf16.mxu0 %v1032
  %1591 = vmatmul.mubr.bf16.gmra.mxu0 %v1031
  %v1592 = vpop.f32.mrf.mxu0
  %v1593 = vadd.f32 %v1172, %v1592
  %v1594 = vpop.f32.mrf.mxu0
  %v1595 = vpop.f32.mrf.mxu0
  %v1596 = vadd.f32 %v1172, %v1595
  %v1597 = vpop.f32.mrf.mxu0
  %1598 = vdwg.mxu0
  %1599 = vmatprep.subr.bf16.mxu0 0
  %1600 = vmatpush1.bf16.msra.mxu0 %v1453
  %1601 = vmatprep.subr.bf16.mxu0 0
  %1602 = vmatpush1.bf16.msra.mxu0 %v1452
  %1603 = vmatprep.subr.bf16.mxu0 0
  %1604 = vmatpush1.bf16.msra.mxu0 %v1451
  %1605 = vmatprep.subr.bf16.mxu0 0
  %1606 = vmatpush1.bf16.msra.mxu0 %v1450
  %1607 = vmatprep.subr.bf16.mxu0 0
  %1608 = vmatpush1.bf16.msra.mxu0 %v1449
  %1609 = vmatprep.subr.bf16.mxu0 0
  %1610 = vmatpush1.bf16.msra.mxu0 %v1448
  %1611 = vmatprep.subr.bf16.mxu0 0
  %1612 = vmatpush1.bf16.msra.mxu0 %v1447
  %1613 = vmatprep.subr.bf16.mxu0 0
  %1614 = vmatpush1.bf16.msra.mxu0 %v1446
  %1615 = vmatprep.subr.bf16.mxu0 0
  %1616 = vmatpush2.bf16.msra.mxu0 %v1461
  %1617 = vmatprep.subr.bf16.mxu0 0
  %1618 = vmatpush2.bf16.msra.mxu0 %v1460
  %1619 = vmatprep.subr.bf16.mxu0 0
  %1620 = vmatpush2.bf16.msra.mxu0 %v1459
  %1621 = vmatprep.subr.bf16.mxu0 0
  %1622 = vmatpush2.bf16.msra.mxu0 %v1458
  %1623 = vmatprep.subr.bf16.mxu0 0
  %1624 = vmatpush2.bf16.msra.mxu0 %v1457
  %1625 = vmatprep.subr.bf16.mxu0 0
  %1626 = vmatpush2.bf16.msra.mxu0 %v1456
  %1627 = vmatprep.subr.bf16.mxu0 0
  %1628 = vmatpush2.bf16.msra.mxu0 %v1455
  %1629 = vmatprep.subr.bf16.mxu0 0
  %1630 = vmatpush2.bf16.msra.mxu0 %v1454
  %1631 = vmatprep.mubr.bf16.mxu0 %v1034
  %1632 = vmatmul.mubr.bf16.gmra.mxu0 %v1033
  %v1633 = vpop.f32.mrf.mxu0
  %v1634 = vadd.f32 %v1593, %v1633
  %v1635 = vpop.f32.mrf.mxu0
  %v1636 = vpop.f32.mrf.mxu0
  %v1637 = vadd.f32 %v1596, %v1636
  %v1638 = vpop.f32.mrf.mxu0
  %1639 = vdwg.mxu0
  %1640 = vmatprep.subr.bf16.mxu0 0
  %1641 = vmatpush1.bf16.msra.mxu0 %v1469
  %1642 = vmatprep.subr.bf16.mxu0 0
  %1643 = vmatpush1.bf16.msra.mxu0 %v1468
  %1644 = vmatprep.subr.bf16.mxu0 0
  %1645 = vmatpush1.bf16.msra.mxu0 %v1467
  %1646 = vmatprep.subr.bf16.mxu0 0
  %1647 = vmatpush1.bf16.msra.mxu0 %v1466
  %1648 = vmatprep.subr.bf16.mxu0 0
  %1649 = vmatpush1.bf16.msra.mxu0 %v1465
  %1650 = vmatprep.subr.bf16.mxu0 0
  %1651 = vmatpush1.bf16.msra.mxu0 %v1464
  %1652 = vmatprep.subr.bf16.mxu0 0
  %1653 = vmatpush1.bf16.msra.mxu0 %v1463
  %1654 = vmatprep.subr.bf16.mxu0 0
  %1655 = vmatpush1.bf16.msra.mxu0 %v1462
  %1656 = vmatprep.subr.bf16.mxu0 0
  %1657 = vmatpush2.bf16.msra.mxu0 %v1477
  %1658 = vmatprep.subr.bf16.mxu0 0
  %1659 = vmatpush2.bf16.msra.mxu0 %v1476
  %1660 = vmatprep.subr.bf16.mxu0 0
  %1661 = vmatpush2.bf16.msra.mxu0 %v1475
  %1662 = vmatprep.subr.bf16.mxu0 0
  %1663 = vmatpush2.bf16.msra.mxu0 %v1474
  %1664 = vmatprep.subr.bf16.mxu0 0
  %1665 = vmatpush2.bf16.msra.mxu0 %v1473
  %1666 = vmatprep.subr.bf16.mxu0 0
  %1667 = vmatpush2.bf16.msra.mxu0 %v1472
  %1668 = vmatprep.subr.bf16.mxu0 0
  %1669 = vmatpush2.bf16.msra.mxu0 %v1471
  %1670 = vmatprep.subr.bf16.mxu0 0
  %1671 = vmatpush2.bf16.msra.mxu0 %v1470
  %1672 = vmatprep.mubr.bf16.mxu0 %v1036
  %1673 = vmatmul.mubr.bf16.gmra.mxu0 %v1035
  %v1674 = vpop.f32.mrf.mxu0
  %v1675 = vadd.f32 %v1634, %v1674
  %v1676 = vpop.f32.mrf.mxu0
  %v1677 = vpop.f32.mrf.mxu0
  %v1678 = vadd.f32 %v1637, %v1677
  %v1679 = vpop.f32.mrf.mxu0
  %1680 = vdwg.mxu0
  %1681 = vmatprep.subr.bf16.mxu0 0
  %1682 = vmatpush1.bf16.msra.mxu0 %v1485
  %1683 = vmatprep.subr.bf16.mxu0 0
  %1684 = vmatpush1.bf16.msra.mxu0 %v1484
  %1685 = vmatprep.subr.bf16.mxu0 0
  %1686 = vmatpush1.bf16.msra.mxu0 %v1483
  %1687 = vmatprep.subr.bf16.mxu0 0
  %1688 = vmatpush1.bf16.msra.mxu0 %v1482
  %1689 = vmatprep.subr.bf16.mxu0 0
  %1690 = vmatpush1.bf16.msra.mxu0 %v1481
  %1691 = vmatprep.subr.bf16.mxu0 0
  %1692 = vmatpush1.bf16.msra.mxu0 %v1480
  %1693 = vmatprep.subr.bf16.mxu0 0
  %1694 = vmatpush1.bf16.msra.mxu0 %v1479
  %1695 = vmatprep.subr.bf16.mxu0 0
  %1696 = vmatpush1.bf16.msra.mxu0 %v1478
  %1697 = vmatprep.subr.bf16.mxu0 0
  %1698 = vmatpush2.bf16.msra.mxu0 %v1493
  %1699 = vmatprep.subr.bf16.mxu0 0
  %1700 = vmatpush2.bf16.msra.mxu0 %v1492
  %1701 = vmatprep.subr.bf16.mxu0 0
  %1702 = vmatpush2.bf16.msra.mxu0 %v1491
  %1703 = vmatprep.subr.bf16.mxu0 0
  %1704 = vmatpush2.bf16.msra.mxu0 %v1490
  %1705 = vmatprep.subr.bf16.mxu0 0
  %1706 = vmatpush2.bf16.msra.mxu0 %v1489
  %1707 = vmatprep.subr.bf16.mxu0 0
  %1708 = vmatpush2.bf16.msra.mxu0 %v1488
  %1709 = vmatprep.subr.bf16.mxu0 0
  %1710 = vmatpush2.bf16.msra.mxu0 %v1487
  %1711 = vmatprep.subr.bf16.mxu0 0
  %1712 = vmatpush2.bf16.msra.mxu0 %v1486
  %1713 = vmatprep.mubr.bf16.mxu0 %v1038
  %1714 = vmatmul.mubr.bf16.gmra.mxu0 %v1037
  %v1715 = vpop.f32.mrf.mxu0
  %v1716 = vadd.f32 %v1675, %v1715
  %v1717 = vpop.f32.mrf.mxu0
  %v1718 = vpop.f32.mrf.mxu0
  %v1719 = vadd.f32 %v1678, %v1718
  %v1720 = vpop.f32.mrf.mxu0
  %1721 = vdwg.mxu0
  %vm1722 = vcmask 15360
  %1723 = vst.msk [vmem:[%s5] sm:$0xff] %vm1722, %v1716
  %1724 = vst.msk [vmem:[%s5 + $0x8] sm:$0xff] %vm1722, %v1719
  // Predicated region
  $region22: #{stgcn_regressor_head.1} parent=0 // pred_check
    _
  $region23: #{stgcn_regressor_head.1} parent=0 // pred_check_branch
    %1726 = sbr.rel (0) target = $region25
  $region24: #{stgcn_regressor_head.1} parent=0 // pred_region
    _
  $region25: #{stgcn_regressor_head.1} parent=0 // pred_fallthru
    _
  // Predicated region
  $region26: #{stgcn_regressor_head.1} parent=0 // pred_check
    _
  $region27: #{stgcn_regressor_head.1} parent=0 // pred_check_branch
    %1728 = sbr.rel (0) target = $region29
  $region28: #{stgcn_regressor_head.1} parent=0 // pred_region
    _
  $region29: #{stgcn_regressor_head.1} parent=0 // pred_fallthru
    _

</llo_original>
